<compile_context>
chip_gen: v7x
topology: tpu7x:2x2x1
jax: 0.10.0
libtpu: 0.0.40
codegen_flags: <defaults>
</compile_context>

<pallas_src>
import functools
import math

import jax
import jax.numpy as jnp
from jax import lax
from jax.experimental import pallas as pl
from jax.experimental.pallas import tpu as pltpu


def _s32(v):
    """Python int -> two's-complement int32 value."""
    v &= 0xFFFFFFFF
    return v - (1 << 32) if v >= (1 << 31) else v


_H1 = _s32(0x9E3779B9)
_H2 = _s32(0x85EBCA6B)
_M1 = _s32(0x7FEB352D)
_M2 = _s32(0x846CA68B)


def _uniform01(shape, row_offset, seed):
    """Counter-based hash -> f32 uniform in [0, 1).

    Uses only int32 adds/muls/xors/logical-shifts + int->float convert, all of
    which lower under Mosaic and under interpret mode (unlike pltpu.prng_*).
    The counter is the global (row, col) index, so different grid tiles get
    different (deterministic) random values.
    """
    r = lax.broadcasted_iota(jnp.int32, shape, 0) + row_offset
    c = lax.broadcasted_iota(jnp.int32, shape, 1)
    seed_c = jnp.int32(_s32(seed * 0x9E3779B9 + 0x7F4A7C15))
    h = r * jnp.int32(_H1) + c * jnp.int32(_H2) + seed_c
    # murmur3/splitmix-style finalizer (int32 wraps; shifts are logical).
    h = h ^ lax.shift_right_logical(h, jnp.int32(16))
    h = h * jnp.int32(_M1)
    h = h ^ lax.shift_right_logical(h, jnp.int32(15))
    h = h * jnp.int32(_M2)
    h = h ^ lax.shift_right_logical(h, jnp.int32(16))
    u24 = jnp.bitwise_and(h, jnp.int32(0x00FFFFFF)).astype(jnp.float32)
    return u24 * jnp.float32(1.0 / (1 << 24))


def _gelu_exact(x):
    # nn.GELU() default = exact erf-based GELU.
    return 0.5 * x * (1.0 + lax.erf(x * (1.0 / math.sqrt(2.0))))


def _ffn_kernel(x_ref, w1_ref, b1_ref, w2_ref, b2_ref, o_ref, acc_ref, *,
                dropout_p, seed, tile_m):
    """Grid = (token tiles i, ff_dim chunks k).
    acc[i] = sum_k gelu(x_i @ w1[:,k] + b1[k]) @ w2[k,:];  epilogue at k==last.
    """
    # NOTE: all program_id / num_programs reads happen at the TOP LEVEL of the
    # kernel body (never inside pl.when closures) so the kernel also lowers
    # under the CPU/interpret fallback.
    k = pl.program_id(1)
    nk = pl.num_programs(1)
    row0 = pl.program_id(0) * tile_m          # global row offset of this tile

    @pl.when(k == 0)
    def _init():
        acc_ref[...] = jnp.zeros_like(acc_ref)

    x = x_ref[...]                                          # [TM, H]
    h = jnp.dot(x, w1_ref[...], preferred_element_type=jnp.float32)
    h = h + b1_ref[...].astype(jnp.float32)                 # [TM, TF]
    h = _gelu_exact(h)
    acc_ref[...] += jnp.dot(h.astype(x.dtype), w2_ref[...],
                            preferred_element_type=jnp.float32)

    @pl.when(k == nk - 1)
    def _finish():
        y = acc_ref[...] + b2_ref[...].astype(jnp.float32)  # [TM, H]
        if dropout_p > 0.0:
            u = _uniform01(y.shape, row0, seed)
            keep = u >= jnp.float32(dropout_p)
            y = jnp.where(keep,
                          y * jnp.float32(1.0 / (1.0 - dropout_p)),
                          jnp.float32(0.0))
        o_ref[...] = y.astype(o_ref.dtype)


def _round_up(x, m):
    return (x + m - 1) // m * m


def _pick_ff_tile(ff_dim, target=2048):
    """Largest multiple of 128 dividing ff_dim and <= target, else full."""
    if ff_dim <= target:
        return ff_dim
    t = (target // 128) * 128
    while t >= 128:
        if ff_dim % t == 0:
            return t
        t -= 128
    return ff_dim


def feed_forward(x, w1, b1, w2, b2, *, dropout_p=0.1, seed=0):
    """Fused y = dropout(gelu(x @ w1 + b1) @ w2 + b2).  x: [..., hidden]."""
    assert 0.0 <= dropout_p < 1.0
    hidden = x.shape[-1]
    ff_dim = w1.shape[1]
    assert w1.shape == (hidden, ff_dim)
    assert b1.shape == (ff_dim,)
    assert w2.shape == (ff_dim, hidden)
    assert b2.shape == (hidden,)

    lead = x.shape[:-1]
    m = math.prod(lead) if lead else 1
    x2d = x.reshape(m, hidden)

    # Token-axis tile: big as VMEM comfortably allows, multiple of 8 sublanes.
    itemsize = jnp.dtype(x.dtype).itemsize
    tm_target = 512 if itemsize <= 2 else 256
    tm = min(tm_target, _round_up(m, 8))
    m_pad = _round_up(m, tm)
    if m_pad != m:
        x2d = jnp.pad(x2d, ((0, m_pad - m), (0, 0)))

    tf = _pick_ff_tile(ff_dim)
    n_m = m_pad // tm
    n_k = ff_dim // tf

    b1_2d = b1.reshape(1, ff_dim)
    b2_2d = b2.reshape(1, hidden)

    kernel = functools.partial(_ffn_kernel, dropout_p=float(dropout_p),
                               seed=int(seed), tile_m=tm)

    # VMEM budget: double-buffered x/out tiles + streamed weight chunks
    # + f32 accumulator + f32 [TM, TF] intermediate, 2x headroom, clamped.
    vmem_bytes = (
        2 * tm * hidden * itemsize                                   # x tiles
        + 2 * tm * hidden * itemsize                                 # out tiles
        + 2 * (hidden * tf + tf * hidden + tf + hidden) * itemsize   # weights
        + tm * hidden * 4                                            # acc
        + 2 * tm * tf * 4                                            # h temp
    )
    vmem_limit = int(min(110 * 1024 * 1024,
                         max(32 * 1024 * 1024, 2 * vmem_bytes)))

    cost = pl.CostEstimate(
        flops=4 * m_pad * hidden * ff_dim,
        transcendentals=m_pad * ff_dim,
        bytes_accessed=(2 * m_pad * hidden + 2 * hidden * ff_dim
                        + ff_dim + hidden) * itemsize,
    )

    out = pl.pallas_call(
        kernel,
        out_shape=jax.ShapeDtypeStruct((m_pad, hidden), x.dtype),
        grid=(n_m, n_k),
        in_specs=[
            pl.BlockSpec((tm, hidden), lambda i, k: (i, 0)),   # x tile
            pl.BlockSpec((hidden, tf), lambda i, k: (0, k)),   # w1 chunk
            pl.BlockSpec((1, tf),      lambda i, k: (0, k)),   # b1 chunk
            pl.BlockSpec((tf, hidden), lambda i, k: (k, 0)),   # w2 chunk
            pl.BlockSpec((1, hidden),  lambda i, k: (0, 0)),   # b2
        ],
        out_specs=pl.BlockSpec((tm, hidden), lambda i, k: (i, 0)),
        scratch_shapes=[pltpu.VMEM((tm, hidden), jnp.float32)],
        compiler_params=pltpu.CompilerParams(
            dimension_semantics=("parallel", "arbitrary"),
            vmem_limit_bytes=vmem_limit,
        ),
        cost_estimate=cost,
    )(x2d, w1, b1_2d, w2, b2_2d)

    out = out[:m]
    return out.reshape(*lead, hidden)


if __name__ == "__main__":
    # Small deterministic example: batch=2, seq=8, hidden=32, ff_dim=64, p=0.1
    batch, seq, hidden, ff_dim = 2, 8, 32, 64
    dropout_p = 0.1

    key = jax.random.PRNGKey(0)
    kx, kw1, kb1, kw2, kb2 = jax.random.split(key, 5)

    x = jax.random.normal(kx, (batch, seq, hidden), dtype=jnp.float32)
    # nn.Linear-style init (uniform +/- 1/sqrt(fan_in)), stored transposed.
    lim1 = 1.0 / math.sqrt(hidden)
    lim2 = 1.0 / math.sqrt(ff_dim)
    w1 = jax.random.uniform(kw1, (hidden, ff_dim), jnp.float32, -lim1, lim1)
    b1 = jax.random.uniform(kb1, (ff_dim,), jnp.float32, -lim1, lim1)
    w2 = jax.random.uniform(kw2, (ff_dim, hidden), jnp.float32, -lim2, lim2)
    b2 = jax.random.uniform(kb2, (hidden,), jnp.float32, -lim2, lim2)

    y = feed_forward(x, w1, b1, w2, b2, dropout_p=dropout_p, seed=1234)
    y = jax.block_until_ready(y)
    assert y.shape == (batch, seq, hidden)

    # Pure-JAX reference (dropout disabled).
    pre = x @ w1 + b1
    ref = 0.5 * pre * (1.0 + lax.erf(pre / math.sqrt(2.0)))
    ref = ref @ w2 + b2

    # 1) Deterministic path matches the reference.
    y0 = feed_forward(x, w1, b1, w2, b2, dropout_p=0.0)
    y0 = jax.block_until_ready(y0)
    assert jnp.allclose(y0, ref, atol=1e-4, rtol=1e-4), "no-dropout mismatch"

    # 2) Dropout path: every element is either exactly 0 or ref/(1-p).
    scale = 1.0 / (1.0 - dropout_p)
    kept = jnp.isclose(y, ref * scale, atol=1e-3, rtol=1e-3)
    dropped = (y == 0.0)
    assert bool(jnp.all(kept | dropped)), "dropout output inconsistent"
    frac = float(jnp.mean(dropped.astype(jnp.float32)))
    assert 0.0 < frac < 0.5, f"dropout fraction implausible: {frac}"

    print("KERNEL_OK")
</pallas_src>

<mosaic_0001>
module attributes {stable_mosaic.version = 11 : i64} {
  func.func @_ffn_kernel(%arg0: i32, %arg1: i32, %arg2: memref<16x32xf32, #tpu.memory_space<vmem>>, %arg3: memref<32x64xf32, #tpu.memory_space<vmem>>, %arg4: memref<1x64xf32, #tpu.memory_space<vmem>>, %arg5: memref<64x32xf32, #tpu.memory_space<vmem>>, %arg6: memref<1x32xf32, #tpu.memory_space<vmem>>, %arg7: memref<16x32xf32, #tpu.memory_space<vmem>>, %arg8: memref<16x32xf32, #tpu.memory_space<vmem>>) attributes {dimension_semantics = [#tpu.dimension_semantics<parallel>, #tpu.dimension_semantics<arbitrary>], iteration_bounds = array<i64: 1, 1>, scalar_prefetch = 0 : i64, scratch_operands = 1 : i64, tpu.core_type = #tpu.core_type<tc>, window_params = [{transform_indices = @transform_0, window_bounds = array<i64: 16, 32>}, {transform_indices = @transform_1, window_bounds = array<i64: 32, 64>}, {transform_indices = @transform_2, window_bounds = array<i64: 1, 64>}, {transform_indices = @transform_3, window_bounds = array<i64: 64, 32>}, {pipeline_mode = #tpu.pipeline_mode<synchronous>, transform_indices = @transform_4, window_bounds = array<i64: 1, 32>}, {transform_indices = @transform_5, window_bounds = array<i64: 16, 32>}]} {
    %c16_i32 = arith.constant 16 : i32
    %0 = arith.muli %arg0, %c16_i32 : i32
    %c0_i32 = arith.constant 0 : i32
    %1 = arith.cmpi eq, %arg1, %c0_i32 : i32
    %2 = arith.extui %1 : i1 to i32
    %c0_i32_0 = arith.constant 0 : i32
    %3 = arith.cmpi ne, %2, %c0_i32_0 : i32
    scf.if %3 {
      %cst_18 = arith.constant 0.000000e+00 : f32
      %26 = vector.broadcast %cst_18 : f32 to vector<16x32xf32>
      %c0_19 = arith.constant 0 : index
      %c0_20 = arith.constant 0 : index
      %27 = vector.load %arg8[%c0_19, %c0_20] : memref<16x32xf32, #tpu.memory_space<vmem>>, vector<16x32xf32>
      tpu.vector_store %arg8[%c0_19, %c0_20], %26 {strides = array<i32>} : memref<16x32xf32, #tpu.memory_space<vmem>>, vector<16x32xf32>,
    } else {
    }
    %c0 = arith.constant 0 : index
    %c0_1 = arith.constant 0 : index
    %4 = vector.load %arg2[%c0, %c0_1] : memref<16x32xf32, #tpu.memory_space<vmem>>, vector<16x32xf32>
    %c0_2 = arith.constant 0 : index
    %c0_3 = arith.constant 0 : index
    %5 = vector.load %arg3[%c0_2, %c0_3] : memref<32x64xf32, #tpu.memory_space<vmem>>, vector<32x64xf32>
    %cst = arith.constant dense<0.000000e+00> : vector<16x64xf32>
    %6 = tpu.matmul %4, %5, %cst {dimension_numbers = #tpu.dot_dimension_numbers<[1], [0], [0], [1], [0, 0, 1, 1], [], []>} : vector<16x32xf32>, vector<32x64xf32>, vector<16x64xf32> -> vector<16x64xf32>
    %c0_4 = arith.constant 0 : index
    %c0_5 = arith.constant 0 : index
    %7 = vector.load %arg4[%c0_4, %c0_5] : memref<1x64xf32, #tpu.memory_space<vmem>>, vector<1x64xf32>
    %8 = vector.broadcast %7 : vector<1x64xf32> to vector<16x64xf32>
    %9 = arith.addf %6, %8 : vector<16x64xf32>
    %cst_6 = arith.constant 5.000000e-01 : f32
    %10 = vector.broadcast %cst_6 : f32 to vector<16x64xf32>
    %11 = arith.mulf %10, %9 : vector<16x64xf32>
    %cst_7 = arith.constant 0.707106769 : f32
    %12 = vector.broadcast %cst_7 : f32 to vector<16x64xf32>
    %13 = arith.mulf %9, %12 : vector<16x64xf32>
    %14 = math.erf %13 : vector<16x64xf32>
    %cst_8 = arith.constant 1.000000e+00 : f32
    %15 = vector.broadcast %cst_8 : f32 to vector<16x64xf32>
    %16 = arith.addf %15, %14 : vector<16x64xf32>
    %17 = arith.mulf %11, %16 : vector<16x64xf32>
    %c0_9 = arith.constant 0 : index
    %c0_10 = arith.constant 0 : index
    %18 = vector.load %arg8[%c0_9, %c0_10] : memref<16x32xf32, #tpu.memory_space<vmem>>, vector<16x32xf32>
    %c0_11 = arith.constant 0 : index
    %c0_12 = arith.constant 0 : index
    %19 = vector.load %arg5[%c0_11, %c0_12] : memref<64x32xf32, #tpu.memory_space<vmem>>, vector<64x32xf32>
    %cst_13 = arith.constant dense<0.000000e+00> : vector<16x32xf32>
    %20 = tpu.matmul %17, %19, %cst_13 {dimension_numbers = #tpu.dot_dimension_numbers<[1], [0], [0], [1], [0, 0, 1, 1], [], []>} : vector<16x64xf32>, vector<64x32xf32>, vector<16x32xf32> -> vector<16x32xf32>
    %21 = arith.addf %18, %20 : vector<16x32xf32>
    %c0_14 = arith.constant 0 : index
    %c0_15 = arith.constant 0 : index
    %22 = vector.load %arg8[%c0_14, %c0_15] : memref<16x32xf32, #tpu.memory_space<vmem>>, vector<16x32xf32>
    tpu.vector_store %arg8[%c0_14, %c0_15], %21 {strides = array<i32>} : memref<16x32xf32, #tpu.memory_space<vmem>>, vector<16x32xf32>,
    %c0_i32_16 = arith.constant 0 : i32
    %23 = arith.cmpi eq, %arg1, %c0_i32_16 : i32
    %24 = arith.extui %23 : i1 to i32
    %c0_i32_17 = arith.constant 0 : i32
    %25 = arith.cmpi ne, %24, %c0_i32_17 : i32
    scf.if %25 {
      %c0_18 = arith.constant 0 : index
      %c0_19 = arith.constant 0 : index
      %26 = vector.load %arg8[%c0_18, %c0_19] : memref<16x32xf32, #tpu.memory_space<vmem>>, vector<16x32xf32>
      %c0_20 = arith.constant 0 : index
      %c0_21 = arith.constant 0 : index
      %27 = vector.load %arg6[%c0_20, %c0_21] : memref<1x32xf32, #tpu.memory_space<vmem>>, vector<1x32xf32>
      %28 = vector.broadcast %27 : vector<1x32xf32> to vector<16x32xf32>
      %29 = arith.addf %26, %28 : vector<16x32xf32>
      %30 = tpu.iota {dimensions = array<i32: 0>} : vector<16x32xi32>
      %31 = vector.broadcast %0 : i32 to vector<16x32xi32>
      %32 = arith.addi %30, %31 : vector<16x32xi32>
      %33 = tpu.iota {dimensions = array<i32: 1>} : vector<16x32xi32>
      %c-1640531527_i32 = arith.constant -1640531527 : i32
      %34 = vector.broadcast %c-1640531527_i32 : i32 to vector<16x32xi32>
      %35 = arith.muli %32, %34 : vector<16x32xi32>
      %c-2048144789_i32 = arith.constant -2048144789 : i32
      %36 = vector.broadcast %c-2048144789_i32 : i32 to vector<16x32xi32>
      %37 = arith.muli %33, %36 : vector<16x32xi32>
      %38 = arith.addi %35, %37 : vector<16x32xi32>
      %c649279959_i32 = arith.constant 649279959 : i32
      %39 = vector.broadcast %c649279959_i32 : i32 to vector<16x32xi32>
      %40 = arith.addi %38, %39 : vector<16x32xi32>
      %c16_i32_22 = arith.constant 16 : i32
      %41 = vector.broadcast %c16_i32_22 : i32 to vector<16x32xi32>
      %42 = arith.shrui %40, %41 : vector<16x32xi32>
      %43 = arith.xori %40, %42 : vector<16x32xi32>
      %c2146121005_i32 = arith.constant 2146121005 : i32
      %44 = vector.broadcast %c2146121005_i32 : i32 to vector<16x32xi32>
      %45 = arith.muli %43, %44 : vector<16x32xi32>
      %c15_i32 = arith.constant 15 : i32
      %46 = vector.broadcast %c15_i32 : i32 to vector<16x32xi32>
      %47 = arith.shrui %45, %46 : vector<16x32xi32>
      %48 = arith.xori %45, %47 : vector<16x32xi32>
      %c-2073254261_i32 = arith.constant -2073254261 : i32
      %49 = vector.broadcast %c-2073254261_i32 : i32 to vector<16x32xi32>
      %50 = arith.muli %48, %49 : vector<16x32xi32>
      %c16_i32_23 = arith.constant 16 : i32
      %51 = vector.broadcast %c16_i32_23 : i32 to vector<16x32xi32>
      %52 = arith.shrui %50, %51 : vector<16x32xi32>
      %53 = arith.xori %50, %52 : vector<16x32xi32>
      %c16777215_i32 = arith.constant 16777215 : i32
      %54 = vector.broadcast %c16777215_i32 : i32 to vector<16x32xi32>
      %55 = arith.andi %53, %54 : vector<16x32xi32>
      %56 = arith.sitofp %55 : vector<16x32xi32> to vector<16x32xf32>
      %cst_24 = arith.constant 5.96046448E-8 : f32
      %57 = vector.broadcast %cst_24 : f32 to vector<16x32xf32>
      %58 = arith.mulf %56, %57 : vector<16x32xf32>
      %cst_25 = arith.constant 1.000000e-01 : f32
      %59 = vector.broadcast %cst_25 : f32 to vector<16x32xf32>
      %60 = arith.cmpf oge, %58, %59 : vector<16x32xf32>
      %cst_26 = arith.constant 1.11111116 : f32
      %61 = vector.broadcast %cst_26 : f32 to vector<16x32xf32>
      %62 = arith.mulf %29, %61 : vector<16x32xf32>
      %cst_27 = arith.constant 0.000000e+00 : f32
      %63 = vector.broadcast %cst_27 : f32 to vector<16x32xf32>
      %64 = arith.select %60, %62, %63 : vector<16x32xi1>, vector<16x32xf32>
      %c0_28 = arith.constant 0 : index
      %c0_29 = arith.constant 0 : index
      %65 = vector.load %arg7[%c0_28, %c0_29] : memref<16x32xf32, #tpu.memory_space<vmem>>, vector<16x32xf32>
      tpu.vector_store %arg7[%c0_28, %c0_29], %64 {strides = array<i32>} : memref<16x32xf32, #tpu.memory_space<vmem>>, vector<16x32xf32>,
    } else {
    }
    return
  }
  func.func @transform_0(%arg0: i32, %arg1: i32) -> (i32, i32) {
    %c0_i32 = arith.constant 0 : i32
    %c0_i32_0 = arith.constant 0 : i32
    return %arg0, %c0_i32 : i32, i32
  }
  func.func @transform_1(%arg0: i32, %arg1: i32) -> (i32, i32) {
    %c0_i32 = arith.constant 0 : i32
    %c0_i32_0 = arith.constant 0 : i32
    return %c0_i32, %arg1 : i32, i32
  }
  func.func @transform_2(%arg0: i32, %arg1: i32) -> (i32, i32) {
    %c0_i32 = arith.constant 0 : i32
    %c0_i32_0 = arith.constant 0 : i32
    return %c0_i32, %arg1 : i32, i32
  }
  func.func @transform_3(%arg0: i32, %arg1: i32) -> (i32, i32) {
    %c0_i32 = arith.constant 0 : i32
    %c0_i32_0 = arith.constant 0 : i32
    return %arg1, %c0_i32 : i32, i32
  }
  func.func @transform_4(%arg0: i32, %arg1: i32) -> (i32, i32) {
    %c0_i32 = arith.constant 0 : i32
    %c0_i32_0 = arith.constant 0 : i32
    %c0_i32_1 = arith.constant 0 : i32
    return %c0_i32, %c0_i32_0 : i32, i32
  }
  func.func @transform_5(%arg0: i32, %arg1: i32) -> (i32, i32) {
    %c0_i32 = arith.constant 0 : i32
    %c0_i32_0 = arith.constant 0 : i32
    return %arg0, %c0_i32 : i32, i32
  }
}

</mosaic_0001>

<llo_original>
// kernel: tpu_custom_call.1
$region0: #{tpu_custom_call.1}
  #allocation0 [shape = 'u32[]', space=smem, size = 0x4, offset = 0x4, fixed_abs, tag = 'smem constant byte address 0x4 - core index']
  #allocation1 [shape = 'u32[144,128]{1,0:T(1,128)}', space=vmem, size = 0x12000, scoped, tag = 'internal scratch']
  #allocation2 [shape = 'f32[16,32]{1,0:T(8,128)}', space=vmem, size = 0x2000, scoped, tag = 'scratch operand']
  %s0 = inlined_call_operand.vmem [shape: f32[16,32], index: 0, kind: input, shape index: {}]
  %s1 = inlined_call_operand.vmem [shape: f32[32,64], index: 1, kind: input, shape index: {}]
  %s2 = inlined_call_operand.vmem [shape: f32[1,64], index: 2, kind: input, shape index: {}]
  %s3 = inlined_call_operand.vmem [shape: f32[64,32], index: 3, kind: input, shape index: {}]
  %s4 = inlined_call_operand.vmem [shape: f32[1,32], index: 4, kind: input, shape index: {}]
  %s5 = inlined_call_operand.hbm [shape: f32[16,32], index: 5, kind: output, shape index: {}]
  %s6 = sld [smem:[#allocation0]]
  $region38: #{tpu_custom_call.1} parent=0
    _
  %s8 = ssub.s32 1, %s6
  %s9 = scalar_select 0, %s8, %s6
  $region1: #{tpu_custom_call.1} parent=0
    #allocation3 [shape = 'u8[8192]{0}', space=vmem, size = 0x2000, scoped, tag = 'output window, operand 0, single buffered']
    #allocation4 [shape = 's32[1]{0}', space=sflag, size = 0x4, scoped, tag = 'scoped memory for tpu_custom_call.1']
    %10 = vsyncpa [#allocation4], 0
    // Predicated region
    $region2: #{tpu_custom_call.1} parent=1 // pred_check
      _
    $region3: #{tpu_custom_call.1} parent=1 // pred_check_branch
      %12 = sbr.rel (0) target = $region5
    $region4: #{tpu_custom_call.1} parent=1 // pred_region
      _
    $region5: #{tpu_custom_call.1} parent=1 // pred_fallthru
      _
    // Predicated region
    $region6: #{tpu_custom_call.1} parent=1 // pred_check
      _
    $region7: #{tpu_custom_call.1} parent=1 // pred_check_branch
      %14 = sbr.rel (0) target = $region9
    $region8: #{tpu_custom_call.1} parent=1 // pred_region
      _
    $region9: #{tpu_custom_call.1} parent=1 // pred_fallthru
      _
    // Predicated region
    $region10: #{tpu_custom_call.1} parent=1 // pred_check
      _
    $region11: #{tpu_custom_call.1} parent=1 // pred_check_branch
      %16 = sbr.rel (0) target = $region13
    $region12: #{tpu_custom_call.1} parent=1 // pred_region
      _
    $region13: #{tpu_custom_call.1} parent=1 // pred_fallthru
      _
    // Predicated region
    $region14: #{tpu_custom_call.1} parent=1 // pred_check
      _
    $region15: #{tpu_custom_call.1} parent=1 // pred_check_branch
      %18 = sbr.rel (0) target = $region17
    $region16: #{tpu_custom_call.1} parent=1 // pred_region
      _
    $region17: #{tpu_custom_call.1} parent=1 // pred_fallthru
      _
    // Predicated region
    $region18: #{tpu_custom_call.1} parent=1 // pred_check
      _
    $region19: #{tpu_custom_call.1} parent=1 // pred_check_branch
      %20 = sbr.rel (0) target = $region21
    $region20: #{tpu_custom_call.1} parent=1 // pred_region
      _
    $region21: #{tpu_custom_call.1} parent=1 // pred_fallthru
      _
    %s21 = smul.u32 0, 16
    %p22 = scmp.eq.s32.totalorder 0, 0
    // Predicated region
    $region22: #{tpu_custom_call.1} parent=1 // pred_check
      %p23 = pneg %p22
    $region23: #{tpu_custom_call.1} parent=1 // pred_check_branch
      %25 = sbr.rel (%p23) target = $region25
    $region24: #{tpu_custom_call.1} parent=1 // pred_region
      %vm26 = vcmask 261120
      %27 = vst.msk [vmem:[#allocation2] sm:$0xff] %vm26, 0.0
      %28 = vst.msk [vmem:[#allocation2 + $0x8] sm:$0xff] %vm26, 0.0
    $region25: #{tpu_custom_call.1} parent=1 // pred_fallthru
      _
    %v29 = vld [vmem:[%s0] sm:$0xff]
    %v30 = vld [vmem:[%s0 + $0x8] sm:$0xff]
    %v31 = vld [vmem:[%s1] sm:$0xff]
    %v32 = vld [vmem:[%s1 + $0x8] sm:$0xff]
    %v33 = vld [vmem:[%s1 + $0x10] sm:$0xff]
    %v34 = vld [vmem:[%s1 + $0x18] sm:$0xff]
    %v35 = vld [vmem:[%s2] sm:$0x1]
    %v37 = vlaneseq
    %v38 = vshrl.u32 %v37, 7
    %v39 = vsub.s32 0, %v38
    %v40 = vrot.slane %v35, %v39
    %vm42 = vcmask 261120
    %v44 = vsel %vm42, %v29, 0
    %v47 = vsel %vm42, %v30, 0
    %49 = vmatprep.subr.mxu0 0.0
    %50 = vmatpush1.msra.mxu0 %v31
    %51 = vmatprep.subr.mxu0 0.0
    %52 = vmatpush1.msra.mxu0 %v32
    %53 = vmatprep.subr.mxu0 0.0
    %54 = vmatpush1.msra.mxu0 %v33
    %55 = vmatprep.subr.mxu0 0.0
    %56 = vmatpush1.msra.mxu0 %v34
    %57 = vmatprep.subr.mxu0 0.0
    %58 = vmatpush1.msra.mxu0 0.0
    %59 = vmatprep.subr.mxu0 0.0
    %60 = vmatpush1.msra.mxu0 0.0
    %61 = vmatprep.subr.mxu0 0.0
    %62 = vmatpush1.msra.mxu0 0.0
    %63 = vmatprep.subr.mxu0 0.0
    %64 = vmatpush1.msra.mxu0 0.0
    %65 = vmatprep.subr.mxu0 0.0
    %66 = vmatpush1.msra.mxu0 0.0
    %67 = vmatprep.subr.mxu0 0.0
    %68 = vmatpush1.msra.mxu0 0.0
    %69 = vmatprep.subr.mxu0 0.0
    %70 = vmatpush1.msra.mxu0 0.0
    %71 = vmatprep.subr.mxu0 0.0
    %72 = vmatpush1.msra.mxu0 0.0
    %73 = vmatprep.subr.mxu0 0.0
    %74 = vmatpush1.msra.mxu0 0.0
    %75 = vmatprep.subr.mxu0 0.0
    %76 = vmatpush1.msra.mxu0 0.0
    %77 = vmatprep.subr.mxu0 0.0
    %78 = vmatpush1.msra.mxu0 0.0
    %79 = vmatprep.subr.mxu0 0.0
    %80 = vmatpush1.msra.mxu0 0.0
    %81 = vmatprep.subr.mxu0 0.0
    %82 = vmatpush1.msra.mxu0 0.0
    %83 = vmatprep.subr.mxu0 0.0
    %84 = vmatpush1.msra.mxu0 0.0
    %85 = vmatprep.subr.mxu0 0.0
    %86 = vmatpush1.msra.mxu0 0.0
    %87 = vmatprep.subr.mxu0 0.0
    %88 = vmatpush1.msra.mxu0 0.0
    %89 = vmatprep.subr.mxu0 0.0
    %90 = vmatpush1.msra.mxu0 0.0
    %91 = vmatprep.subr.mxu0 0.0
    %92 = vmatpush1.msra.mxu0 0.0
    %93 = vmatprep.subr.mxu0 0.0
    %94 = vmatpush1.msra.mxu0 0.0
    %95 = vmatprep.subr.mxu0 0.0
    %96 = vmatpush1.msra.mxu0 0.0
    %97 = vmatprep.subr.mxu0 0.0
    %98 = vmatpush1.msra.mxu0 0.0
    %99 = vmatprep.subr.mxu0 0.0
    %100 = vmatpush1.msra.mxu0 0.0
    %101 = vmatprep.subr.mxu0 0.0
    %102 = vmatpush1.msra.mxu0 0.0
    %103 = vmatprep.subr.mxu0 0.0
    %104 = vmatpush1.msra.mxu0 0.0
    %105 = vmatprep.subr.mxu0 0.0
    %106 = vmatpush1.msra.mxu0 0.0
    %107 = vmatprep.subr.mxu0 0.0
    %108 = vmatpush1.msra.mxu0 0.0
    %109 = vmatprep.subr.mxu0 0.0
    %110 = vmatpush1.msra.mxu0 0.0
    %111 = vmatprep.subr.mxu0 0.0
    %112 = vmatpush1.msra.mxu0 0.0
    %113 = vmatprep.mubr.f32.mxu0 0.0
    %114 = vmatmul.mubr.f32.gmra.mrb[0].mxu0 %v44
    %v115 = vpop.f32.mrb[0].mxu0
    %v116 = vadd.f32 %v40, %v115
    %v117 = vpop.f32.mrb[0].mxu0
    %118 = vmatprep.mubr.f32.mxu0 0.0
    %119 = vmatmul.mubr.f32.gmra.mrb[0].mxu0 %v47
    %v120 = vpop.f32.mrb[0].mxu0
    %v121 = vadd.f32 %v40, %v120
    %v122 = vpop.f32.mrb[0].mxu0
    %123 = vdwg.mxu0
    %v124 = vmul.f32 %v116, 0.5
    %v125 = vmul.f32 %v121, 0.5
    %v126 = vmul.f32 %v116, 0.70710677
    %v127 = vmul.f32 %v121, 0.70710677
    %v128 = verf.f32.pop %v126
    %v129 = verf.f32.pop %v127
    %v130 = vadd.f32 %v128, 1.0
    %v131 = vadd.f32 %v129, 1.0
    %v132 = vmul.f32 %v124, %v130
    %v133 = vmul.f32 %v125, %v131
    %v134 = vld [vmem:[#allocation2] sm:$0xff]
    %v135 = vld [vmem:[#allocation2 + $0x8] sm:$0xff]
    %v136 = vld [vmem:[%s3] sm:$0xff]
    %v137 = vld [vmem:[%s3 + $0x8] sm:$0xff]
    %v138 = vld [vmem:[%s3 + $0x10] sm:$0xff]
    %v139 = vld [vmem:[%s3 + $0x18] sm:$0xff]
    %v140 = vld [vmem:[%s3 + $0x20] sm:$0xff]
    %v141 = vld [vmem:[%s3 + $0x28] sm:$0xff]
    %v142 = vld [vmem:[%s3 + $0x30] sm:$0xff]
    %v143 = vld [vmem:[%s3 + $0x38] sm:$0xff]
    %vm144 = vcmask 523264
    %v146 = vsel %vm144, %v132, 0
    %v149 = vsel %vm144, %v133, 0
    %151 = vmatprep.subr.mxu0 0.0
    %152 = vmatpush1.msra.mxu0 %v136
    %153 = vmatprep.subr.mxu0 0.0
    %154 = vmatpush1.msra.mxu0 %v137
    %155 = vmatprep.subr.mxu0 0.0
    %156 = vmatpush1.msra.mxu0 %v138
    %157 = vmatprep.subr.mxu0 0.0
    %158 = vmatpush1.msra.mxu0 %v139
    %159 = vmatprep.subr.mxu0 0.0
    %160 = vmatpush1.msra.mxu0 %v140
    %161 = vmatprep.subr.mxu0 0.0
    %162 = vmatpush1.msra.mxu0 %v141
    %163 = vmatprep.subr.mxu0 0.0
    %164 = vmatpush1.msra.mxu0 %v142
    %165 = vmatprep.subr.mxu0 0.0
    %166 = vmatpush1.msra.mxu0 %v143
    %167 = vmatprep.subr.mxu0 0.0
    %168 = vmatpush1.msra.mxu0 0.0
    %169 = vmatprep.subr.mxu0 0.0
    %170 = vmatpush1.msra.mxu0 0.0
    %171 = vmatprep.subr.mxu0 0.0
    %172 = vmatpush1.msra.mxu0 0.0
    %173 = vmatprep.subr.mxu0 0.0
    %174 = vmatpush1.msra.mxu0 0.0
    %175 = vmatprep.subr.mxu0 0.0
    %176 = vmatpush1.msra.mxu0 0.0
    %177 = vmatprep.subr.mxu0 0.0
    %178 = vmatpush1.msra.mxu0 0.0
    %179 = vmatprep.subr.mxu0 0.0
    %180 = vmatpush1.msra.mxu0 0.0
    %181 = vmatprep.subr.mxu0 0.0
    %182 = vmatpush1.msra.mxu0 0.0
    %183 = vmatprep.subr.mxu0 0.0
    %184 = vmatpush1.msra.mxu0 0.0
    %185 = vmatprep.subr.mxu0 0.0
    %186 = vmatpush1.msra.mxu0 0.0
    %187 = vmatprep.subr.mxu0 0.0
    %188 = vmatpush1.msra.mxu0 0.0
    %189 = vmatprep.subr.mxu0 0.0
    %190 = vmatpush1.msra.mxu0 0.0
    %191 = vmatprep.subr.mxu0 0.0
    %192 = vmatpush1.msra.mxu0 0.0
    %193 = vmatprep.subr.mxu0 0.0
    %194 = vmatpush1.msra.mxu0 0.0
    %195 = vmatprep.subr.mxu0 0.0
    %196 = vmatpush1.msra.mxu0 0.0
    %197 = vmatprep.subr.mxu0 0.0
    %198 = vmatpush1.msra.mxu0 0.0
    %199 = vmatprep.subr.mxu0 0.0
    %200 = vmatpush1.msra.mxu0 0.0
    %201 = vmatprep.subr.mxu0 0.0
    %202 = vmatpush1.msra.mxu0 0.0
    %203 = vmatprep.subr.mxu0 0.0
    %204 = vmatpush1.msra.mxu0 0.0
    %205 = vmatprep.subr.mxu0 0.0
    %206 = vmatpush1.msra.mxu0 0.0
    %207 = vmatprep.subr.mxu0 0.0
    %208 = vmatpush1.msra.mxu0 0.0
    %209 = vmatprep.subr.mxu0 0.0
    %210 = vmatpush1.msra.mxu0 0.0
    %211 = vmatprep.subr.mxu0 0.0
    %212 = vmatpush1.msra.mxu0 0.0
    %213 = vmatprep.subr.mxu0 0.0
    %214 = vmatpush1.msra.mxu0 0.0
    %215 = vmatprep.mubr.f32.mxu0 0.0
    %216 = vmatmul.mubr.f32.gmra.mrb[0].mxu0 %v146
    %v217 = vpop.f32.mrb[0].mxu0
    %v218 = vadd.f32 0.0, %v217
    %v219 = vpop.f32.mrb[0].mxu0
    %220 = vmatprep.mubr.f32.mxu0 0.0
    %221 = vmatmul.mubr.f32.gmra.mrb[0].mxu0 %v149
    %v222 = vpop.f32.mrb[0].mxu0
    %v223 = vadd.f32 0.0, %v222
    %v224 = vpop.f32.mrb[0].mxu0
    %225 = vdwg.mxu0
    %v226 = vadd.f32 %v134, %v218
    %v227 = vadd.f32 %v135, %v223
    %228 = vst.msk [vmem:[#allocation2] sm:$0xff] %vm42, %v226
    %229 = vst.msk [vmem:[#allocation2 + $0x8] sm:$0xff] %vm42, %v227
    // Predicated region
    $region26: #{tpu_custom_call.1} parent=1 // pred_check
      %p230 = pneg %p22
    $region27: #{tpu_custom_call.1} parent=1 // pred_check_branch
      %232 = sbr.rel (%p230) target = $region29
    $region28: #{tpu_custom_call.1} parent=1 // pred_region
      %v233 = vld [vmem:[#allocation2] sm:$0xff]
      %v234 = vld [vmem:[#allocation2 + $0x8] sm:$0xff]
      %v235 = vld [vmem:[%s4] sm:$0x1]
      %v237 = vlaneseq
      %v238 = vshrl.u32 %v237, 7
      %v239 = vsub.s32 0, %v238
      %v240 = vrot.slane %v235, %v239
      %v242 = vadd.f32 %v233, %v240
      %v243 = vadd.f32 %v234, %v240
      %v244 = vlaneseq
      %v245 = vshrl.u32 %v244, 7
      %v246 = vadd.s32 %v245, 8
      %v247 = vstv %s21
      %v248 = vadd.s32 %v245, %v247
      %v249 = vadd.s32 %v246, %v247
      %v250 = vlaneseq
      %v251 = vand.u32 %v250, 127
      %v252 = vmul.u32 %v248, 2654435769
      %v253 = vmul.u32 %v249, 2654435769
      %v254 = vmul.u32 %v251, 2246822507
      %v255 = vadd.s32 %v252, %v254
      %v256 = vadd.s32 %v253, %v254
      %v257 = vadd.s32 %v255, 649279959
      %v258 = vadd.s32 %v256, 649279959
      %v259 = vshrl.u32 %v257, 16
      %v260 = vshrl.u32 %v258, 16
      %v261 = vxor.u32 %v257, %v259
      %v262 = vxor.u32 %v258, %v260
      %v263 = vmul.u32 %v261, 2146121005
      %v264 = vmul.u32 %v262, 2146121005
      %v265 = vshrl.u32 %v263, 15
      %v266 = vshrl.u32 %v264, 15
      %v267 = vxor.u32 %v263, %v265
      %v268 = vxor.u32 %v264, %v266
      %v269 = vmul.u32 %v267, 2221713035
      %v270 = vmul.u32 %v268, 2221713035
      %v271 = vshrl.u32 %v269, 16
      %v272 = vshrl.u32 %v270, 16
      %v273 = vxor.u32 %v269, %v271
      %v274 = vxor.u32 %v270, %v272
      %v275 = vand.u32 %v273, 16777215
      %v276 = vand.u32 %v274, 16777215
      %v277 = vcvt.s32.f32 %v275
      %v278 = vcvt.s32.f32 %v276
      %v279 = vmul.f32 %v277, 5.9604645e-08
      %v280 = vmul.f32 %v278, 5.9604645e-08
      %vm281 = vcmp.ge.f32.partialorder %v279, 0.1
      %vm282 = vcmp.ge.f32.partialorder %v280, 0.1
      %v283 = vmul.f32 %v242, 1.1111112
      %v284 = vmul.f32 %v243, 1.1111112
      %v285 = vsel %vm281, %v283, 0.0
      %v286 = vsel %vm282, %v284, 0.0
      %287 = vst.msk [vmem:[#allocation3] sm:$0xff] %vm42, %v285
      %288 = vst.msk [vmem:[#allocation3 + $0x8] sm:$0xff] %vm42, %v286
    $region29: #{tpu_custom_call.1} parent=1 // pred_fallthru
      _
    // Predicated region
    $region30: #{tpu_custom_call.1} parent=1 // pred_check
      _
    $region31: #{tpu_custom_call.1} parent=1 // pred_check_branch
      %290 = sbr.rel (0) target = $region33
    $region32: #{tpu_custom_call.1} parent=1 // pred_region
      %s292 = ssub.s32 256, 256
      %293 = vsyncadd [#allocation4], %s292
      %s294 = sshll.u32 [#allocation3], 4
      %s295 = int_to_ptr.vmem [resolvable:$true] %s294
      %300 = dma.vmem_to_hbm [thread:$0]  %s295, 256, %s5, [#allocation4], 128, 128, 8
    $region33: #{tpu_custom_call.1} parent=1 // pred_fallthru
      _
    // Predicated region
    $region34: #{tpu_custom_call.1} parent=1 // pred_check
      _
    $region35: #{tpu_custom_call.1} parent=1 // pred_check_branch
      %302 = sbr.rel (0) target = $region37
    $region36: #{tpu_custom_call.1} parent=1 // pred_region
      %303 = dma.done [#allocation4], 256
    $region37: #{tpu_custom_call.1} parent=1 // pred_fallthru
      _
    %304 = vsyncpa [#allocation4], 1

</llo_original>
